<compile_context>
chip_gen: v7x
topology: tpu7x:2x2x1
jax: 0.10.0
libtpu: 0.0.40
codegen_flags: <defaults>
</compile_context>

<pallas_src>
import jax
import jax.numpy as jnp
from jax.experimental import pallas as pl
from jax.experimental.pallas import tpu as pltpu


# --------------------- gridded per-level path (large levels) ----------------

def _film_level_kernel(w_ref, o_ref):
    # w_ref: (tile_rows, 1) VMEM, o_ref: (tile_rows, HW) VMEM.
    # One lane-broadcast + one wide unmasked store per block; the pipeline is
    # purely DMA / HBM-writeback bound.
    o_ref[...] = jnp.broadcast_to(w_ref[...], o_ref.shape)


def _film_level_gridded(w_col, rows, hw, tile_rows):
    """w_col: (rows, 1) float32.  Returns (rows, hw) slab."""
    n_tiles = pl.cdiv(rows, tile_rows)
    return pl.pallas_call(
        _film_level_kernel,
        out_shape=jax.ShapeDtypeStruct((rows, hw), w_col.dtype),
        grid=(n_tiles,),
        in_specs=[pl.BlockSpec((tile_rows, 1), lambda i: (i, 0))],
        out_specs=pl.BlockSpec((tile_rows, hw), lambda i: (i, 0)),
        compiler_params=pltpu.CompilerParams(
            dimension_semantics=("parallel",)),
    )(w_col)


def _choose_tile_rows(rows, hw, itemsize, target_block_bytes):
    """Row-tile: ~target_block_bytes per block, multiple of 8 sublanes."""
    if rows <= 8:
        return rows
    t = max(1, target_block_bytes // (hw * itemsize))
    t = (t // 8) * 8
    if t <= 0:
        t = 8
    if t >= rows:
        return rows
    return t


# ----------------- fused small-levels path (single dispatch) ----------------

def _make_fused_small_kernel(n_levels):
    def kernel(*refs):
        w_refs = refs[:n_levels]
        o_refs = refs[n_levels:]
        for w_ref, o_ref in zip(w_refs, o_refs):
            # (rows, 1) -> (rows, hw): single lane broadcast, single store.
            o_ref[...] = jnp.broadcast_to(w_ref[...], o_ref.shape)
    return kernel


def _film_small_levels_fused(w_cols, slab_shapes):
    """All tiny levels in one no-grid call (outputs easily fit VMEM)."""
    kernel = _make_fused_small_kernel(len(w_cols))
    out_shape = tuple(jax.ShapeDtypeStruct(s, w.dtype)
                      for w, s in zip(w_cols, slab_shapes))
    vmem = pl.BlockSpec(memory_space=pltpu.MemorySpace.VMEM)
    outs = pl.pallas_call(
        kernel,
        out_shape=out_shape,
        in_specs=[vmem] * len(w_cols),
        out_specs=tuple(vmem for _ in w_cols),
    )(*w_cols)
    return list(outs)


# ------------------------------- module --------------------------------------

class NeuralFilmPyramid:
    """JAX/Pallas port of models/archs/NIRE_arch.NeuralFilmPyramid.

    Each level holds an nn.Embedding(1, dim) weight; forward broadcasts the
    (1, dim) weight over the batch and spatial dims of each pyramid level.
    """

    def __init__(self, dims, key):
        self.encoder_output_sizes = list(dims)
        self.pix_embed_weights = []
        for i, enc_out_dim in enumerate(self.encoder_output_sizes):
            k = jax.random.fold_in(key, i)
            # nn.Embedding default init: N(0, 1)
            w = jax.random.normal(k, (1, enc_out_dim), dtype=jnp.float32)
            self.pix_embed_weights.append(w)

    def forward(self, seq_shape_list, seq_len=1, *,
                small_level_bytes=512 * 1024,
                target_block_bytes=2 * 1024 * 1024):
        assert len(self.pix_embed_weights) == len(seq_shape_list)

        levels = []
        for w, seq_shape in zip(self.pix_embed_weights, seq_shape_list):
            B, _, C, H, W = seq_shape
            assert C == w.shape[1]
            rows, hw = B * C, H * W
            # Tiny (B*C, 1) weight column built in the wrapper; the heavy
            # (B*C, H*W) broadcast happens inside the kernel so HBM writeback
            # is the only real traffic.
            w_col = jnp.tile(w.reshape(C, 1), (B, 1))
            levels.append(dict(B=B, C=C, H=H, W=W, rows=rows, hw=hw,
                               w_col=w_col))

        itemsize = 4  # float32
        slabs = [None] * len(levels)
        small_idx, small_wcols, small_shapes = [], [], []

        for idx, lv in enumerate(levels):
            nbytes = lv["rows"] * lv["hw"] * itemsize
            if nbytes <= small_level_bytes:
                small_idx.append(idx)
                small_wcols.append(lv["w_col"])
                small_shapes.append((lv["rows"], lv["hw"]))
            else:
                tile_rows = _choose_tile_rows(lv["rows"], lv["hw"], itemsize,
                                              target_block_bytes)
                slabs[idx] = _film_level_gridded(
                    lv["w_col"], lv["rows"], lv["hw"], tile_rows)

        if small_idx:
            outs = _film_small_levels_fused(small_wcols, small_shapes)
            for idx, o in zip(small_idx, outs):
                slabs[idx] = o

        # (B*C, H*W) -> (B, C, H, W) is a free, contiguous reshape.
        vir_feat_pyr = [
            slab.reshape(lv["B"], lv["C"], lv["H"], lv["W"])
            for slab, lv in zip(slabs, levels)
        ]
        # Same semantics as the PyTorch code: seq_len references to the same
        # list of per-level tensors.
        return [vir_feat_pyr] * seq_len


if __name__ == "__main__":
    key = jax.random.PRNGKey(0)

    dims = [4, 8, 16, 32]
    B = 2
    seq_shape_list = [
        (B, 1, 4, 16, 16),   # rows=8,  hw=256 ->  8 KB  (small fused path)
        (B, 1, 8, 8, 8),     # rows=16, hw=64  ->  4 KB  (small fused path)
        (B, 1, 16, 4, 4),    # rows=32, hw=16  ->  2 KB  (small fused path)
        (B, 1, 32, 16, 16),  # rows=64, hw=256 -> 64 KB  (gridded path)
    ]
    seq_len = 2

    model = NeuralFilmPyramid(dims, key)
    # Thresholds chosen so BOTH code paths are exercised at these toy shapes:
    # levels 0-2 go through the fused no-grid call, level 3 goes through the
    # gridded pipeline with grid=(4,).
    out = model.forward(seq_shape_list, seq_len=seq_len,
                        small_level_bytes=32 * 1024,
                        target_block_bytes=16 * 1024)

    # Block on all results.
    for pyr in out:
        for t in pyr:
            jax.block_until_ready(t)

    # Verify against the pure-JAX reference semantics.
    assert len(out) == seq_len
    for pyr in out:
        assert len(pyr) == len(dims)
        for weight, seq_shape, got in zip(model.pix_embed_weights,
                                          seq_shape_list, pyr):
            Bx, _, C, H, W = seq_shape
            ref = jnp.broadcast_to(weight[0][None, :, None, None],
                                   (Bx, C, H, W))
            assert got.shape == (Bx, C, H, W), got.shape
            assert got.dtype == jnp.float32
            assert jnp.allclose(got, ref), "mismatch vs reference broadcast"

    print("KERNEL_OK")
</pallas_src>

<mosaic_0001>
module attributes {stable_mosaic.version = 11 : i64} {
  func.func @_film_level_kernel(%arg0: i32, %arg1: memref<16x1xf32, #tpu.memory_space<vmem>>, %arg2: memref<16x256xf32, #tpu.memory_space<vmem>>) attributes {dimension_semantics = [#tpu.dimension_semantics<parallel>], iteration_bounds = array<i64: 4>, scalar_prefetch = 0 : i64, scratch_operands = 0 : i64, tpu.core_type = #tpu.core_type<tc>, window_params = [{transform_indices = @transform_0, window_bounds = array<i64: 16, 1>}, {transform_indices = @transform_1, window_bounds = array<i64: 16, 256>}]} {
    %c0 = arith.constant 0 : index
    %c0_0 = arith.constant 0 : index
    %0 = vector.load %arg1[%c0, %c0_0] : memref<16x1xf32, #tpu.memory_space<vmem>>, vector<16x1xf32>
    %1 = vector.shape_cast %0 : vector<16x1xf32> to vector<16x1xf32>
    %2 = vector.broadcast %1 : vector<16x1xf32> to vector<16x256xf32>
    %c0_1 = arith.constant 0 : index
    %c0_2 = arith.constant 0 : index
    %3 = vector.load %arg2[%c0_1, %c0_2] : memref<16x256xf32, #tpu.memory_space<vmem>>, vector<16x256xf32>
    tpu.vector_store %arg2[%c0_1, %c0_2], %2 {strides = array<i32>} : memref<16x256xf32, #tpu.memory_space<vmem>>, vector<16x256xf32>,
    return
  }
  func.func @transform_0(%arg0: i32) -> (i32, i32) {
    %c0_i32 = arith.constant 0 : i32
    %c0_i32_0 = arith.constant 0 : i32
    return %arg0, %c0_i32 : i32, i32
  }
  func.func @transform_1(%arg0: i32) -> (i32, i32) {
    %c0_i32 = arith.constant 0 : i32
    %c0_i32_0 = arith.constant 0 : i32
    return %arg0, %c0_i32 : i32, i32
  }
}

</mosaic_0001>

<llo_original>
// kernel: tpu_custom_call.1
$region0: #{tpu_custom_call.1}
  #allocation0 [shape = 'u32[]', space=smem, size = 0x4, offset = 0x4, fixed_abs, tag = 'smem constant byte address 0x4 - core index']
  #allocation1 [shape = 'u32[144,128]{1,0:T(1,128)}', space=vmem, size = 0x12000, scoped, tag = 'internal scratch']
  %s0 = inlined_call_operand.vmem [shape: f32[64,1], index: 0, kind: input, shape index: {}]
  %s1 = inlined_call_operand.hbm [shape: f32[64,256], index: 1, kind: output, shape index: {}]
  %s2 = sld [smem:[#allocation0]]
  $region37: #{tpu_custom_call.1} parent=0
    _
  %s4 = ssub.s32 1, %s2
  %s5 = scalar_select 0, %s4, %s2
  $region1: #{tpu_custom_call.1} parent=0
    #allocation2 [shape = 'u8[32768]{0}', space=vmem, size = 0x8000, scoped, tag = 'output window, operand 0']
    #allocation3 [shape = 's32[2]{0}', space=sflag, size = 0x8, scoped, tag = 'scoped memory for tpu_custom_call.1']
    %6 = vsyncpa [#allocation3], 0
    %s7 = scalar_lea.sflag [#allocation3], 1
    %8 = vsyncpa %s7, 0
    loop: start=0, step=1, limit=6
    $region2: #{tpu_custom_call.1} parent=1 // loop_pre_header
      _
    $region3: #{tpu_custom_call.1} parent=1 // loop_header
      %s10 = sphi 0, %s14
      %p11 = scmp.ge.s32.totalorder %s10, 6
      %s20 = sphi 0, %s22
      %s23 = sphi 0, %s20
      %s24 = sphi 0, %s23
      %s40 = sphi 0, %s24
      %s46 = sphi 0, %s48
      %s49 = sphi 0, %s46
      %s50 = sphi 0, %s49
      %s66 = sphi 0, %s50
    $region4: #{tpu_custom_call.1} parent=1 // loop_header_branch
      %13 = sbr.rel (%p11) target = $region8
    $region5: #{tpu_custom_call.1} parent=1 // loop_body
      %s15 = ssub.s32 %s10, 1
      %s16 = ssub.s32 %s10, 2
      %s17 = sadd.s32 %s10, 1
      %s18 = ssub.s32 %s10, %s17
      %p19 = scmp.eq.s32.totalorder %s18, 0
      %s21 = sadd.s32 %s20, 1
      %s22 = scalar_select %p19, %s20, %s21
      %p25 = pneg %p19
      %p26 = scmp.eq.s32.totalorder %s10, 3
      %p27 = por %p25, %p26
      %p28 = scmp.ne.s32.totalorder %s20, %s23
      %p29 = scmp.eq.s32.totalorder %s10, 0
      %p30 = por %p28, %p29
      %p31 = scmp.ne.s32.totalorder %s20, %s23
      %p32 = scmp.eq.s32.totalorder %s15, 3
      %p33 = por %p31, %p32
      %p34 = scmp.ne.s32.totalorder %s23, %s24
      %p35 = scmp.eq.s32.totalorder %s15, 0
      %p36 = por %p34, %p35
      %p37 = scmp.ne.s32.totalorder %s23, %s24
      %p38 = scmp.eq.s32.totalorder %s16, 3
      %p39 = por %p37, %p38
      %p41 = scmp.ne.s32.totalorder %s24, %s40
      %p42 = scmp.eq.s32.totalorder %s16, 0
      %p43 = por %p41, %p42
      %s44 = ssub.s32 %s10, %s17
      %p45 = scmp.eq.s32.totalorder %s44, 0
      %s47 = sadd.s32 %s46, 1
      %s48 = scalar_select %p45, %s46, %s47
      %p51 = pneg %p45
      %p52 = scmp.eq.s32.totalorder %s10, 3
      %p53 = por %p51, %p52
      %p54 = scmp.ne.s32.totalorder %s46, %s49
      %p55 = scmp.eq.s32.totalorder %s10, 0
      %p56 = por %p54, %p55
      %p57 = scmp.ne.s32.totalorder %s46, %s49
      %p58 = scmp.eq.s32.totalorder %s15, 3
      %p59 = por %p57, %p58
      %p60 = scmp.ne.s32.totalorder %s49, %s50
      %p61 = scmp.eq.s32.totalorder %s15, 0
      %p62 = por %p60, %p61
      %p63 = scmp.ne.s32.totalorder %s49, %s50
      %p64 = scmp.eq.s32.totalorder %s16, 3
      %p65 = por %p63, %p64
      %p67 = scmp.ne.s32.totalorder %s50, %s66
      %p68 = scmp.eq.s32.totalorder %s16, 0
      %p69 = por %p67, %p68
      %p70 = scmp.le.s32.totalorder 1, %s10
      %p71 = scmp.lt.s32.totalorder %s10, 5
      %p72 = pnand %p70, %p71
      %p73 = pneg %p72
      // Predicated region
      $region9: #{tpu_custom_call.1} parent=5 // pred_check
        _
      $region10: #{tpu_custom_call.1} parent=5 // pred_check_branch
        %75 = sbr.rel (%p72) target = $region12
      $region11: #{tpu_custom_call.1} parent=5 // pred_region
        %s76 = ssub.s32 %s10, 1
      $region12: #{tpu_custom_call.1} parent=5 // pred_fallthru
        _
      %p77 = scmp.lt.s32.totalorder %s10, 4
      // Predicated region
      $region13: #{tpu_custom_call.1} parent=5 // pred_check
        %p78 = pneg %p77
      $region14: #{tpu_custom_call.1} parent=5 // pred_check_branch
        %80 = sbr.rel (%p78) target = $region16
      $region15: #{tpu_custom_call.1} parent=5 // pred_region
        // Predicated region
        $region17: #{tpu_custom_call.1} parent=15 // pred_check
          %p81 = pneg %p30
        $region18: #{tpu_custom_call.1} parent=15 // pred_check_branch
          %83 = sbr.rel (%p81) target = $region20
        $region19: #{tpu_custom_call.1} parent=15 // pred_region
          %s84 = smul.u32 2, %s10
          %p85 = scmp.lt.s32.totalorder %s84, 7
          %s86 = scalar_select %p85, %s84, 7
          %s87 = smul.addr %s86, 8
          %s88 = scalar_lea.vmem %s0, %s87
          %s89 = smul.u32 2, %s10
        $region20: #{tpu_custom_call.1} parent=15 // pred_fallthru
          _
      $region16: #{tpu_custom_call.1} parent=5 // pred_fallthru
        _
      %p90 = scmp.le.s32.totalorder 1, %s10
      %p91 = scmp.lt.s32.totalorder %s10, 5
      %p92 = pnand %p90, %p91
      %p93 = pneg %p92
      // Predicated region
      $region21: #{tpu_custom_call.1} parent=5 // pred_check
        _
      $region22: #{tpu_custom_call.1} parent=5 // pred_check_branch
        %95 = sbr.rel (%p92) target = $region24
      $region23: #{tpu_custom_call.1} parent=5 // pred_region
        %s96 = ssub.s32 %s10, 1
        %s97 = smul.u32 2, %s15
        %p98 = scmp.lt.s32.totalorder %s97, 7
        %s99 = scalar_select %p98, %s97, 7
        %s100 = smul.addr %s99, 8
        %s101 = scalar_lea.vmem %s0, %s100
        %p102 = pneg %p36
        %p103 = pneg %p33
        %p104 = pneg %p62
        %p105 = pneg %p59
        %s106 = sand.u32 %s49, 1
        %s107 = scalar_lea.sflag [#allocation3], %s106
        %s108 = sand.u32 %s49, 1
        %s109 = smul.addr %s108, 32
        %s110 = scalar_lea.vmem [#allocation2], %s109
        %s111 = smul.u32 2, %s15
        %p112 = scmp.lt.s32.totalorder %s111, 7
        %s113 = scalar_select %p112, %s111, 7
        %s114 = smul.addr %s113, 8
        %s115 = scalar_lea.vmem %s0, %s114
        %s116 = smul.u32 2, %s15
        %s117 = smul.u32 2, %s15
        %v118 = vld [vmem:[%s115] sm:$0xff]
        %v119 = vld [vmem:[%s115 + $0x8] sm:$0xff]
        %121 = vset.pattern.permute.xlu0 0
        %122 = vperm.xlu0 %121, %v118
        %v123 = vpop.permute.xlu0 %122
        %126 = vset.pattern.permute.xlu0 0
        %127 = vperm.xlu0 %126, %v119
        %v128 = vpop.permute.xlu0 %127
        %130 = vst [vmem:[%s110] sm:$0xff] %v123
        %131 = vst [vmem:[%s110 + $0x8] sm:$0xff] %v123
        %132 = vst [vmem:[%s110 + $0x10] sm:$0xff] %v128
        %133 = vst [vmem:[%s110 + $0x18] sm:$0xff] %v128
        %s134 = sand.u32 %s49, 1
        %s135 = scalar_lea.sflag [#allocation3], %s134
        %s136 = sand.u32 %s49, 1
        %s137 = smul.addr %s136, 32
        %s138 = scalar_lea.vmem [#allocation2], %s137
        // Predicated region
        $region25: #{tpu_custom_call.1} parent=23 // pred_check
          %p139 = pneg %p59
        $region26: #{tpu_custom_call.1} parent=23 // pred_check_branch
          %141 = sbr.rel (%p139) target = $region28
        $region27: #{tpu_custom_call.1} parent=23 // pred_region
          %s142 = smul.u32 2, %s15
          %s144 = ssub.s32 512, 512
          %145 = vsyncadd %s135, %s144
          %s146 = smul.addr %s142, 2
          %s147 = smul.addr %s146, 128
          %s148 = scalar_lea.hbm %s1, %s147
          %s149 = sshll.u32 %s138, 4
          %s150 = int_to_ptr.vmem [resolvable:$true] %s149
          %155 = dma.vmem_to_hbm [thread:$0]  %s150, 512, %s148, %s135, 256, 256, 16
        $region28: #{tpu_custom_call.1} parent=23 // pred_fallthru
          _
      $region24: #{tpu_custom_call.1} parent=5 // pred_fallthru
        _
      %p156 = scmp.le.s32.totalorder 2, %s10
      // Predicated region
      $region29: #{tpu_custom_call.1} parent=5 // pred_check
        %p157 = pneg %p156
      $region30: #{tpu_custom_call.1} parent=5 // pred_check_branch
        %159 = sbr.rel (%p157) target = $region32
      $region31: #{tpu_custom_call.1} parent=5 // pred_region
        %s160 = ssub.s32 %s10, 2
        // Predicated region
        $region33: #{tpu_custom_call.1} parent=31 // pred_check
          %p161 = pneg %p65
        $region34: #{tpu_custom_call.1} parent=31 // pred_check_branch
          %163 = sbr.rel (%p161) target = $region36
        $region35: #{tpu_custom_call.1} parent=31 // pred_region
          %s164 = sand.u32 %s50, 1
          %s165 = scalar_lea.sflag [#allocation3], %s164
          %s166 = sand.u32 %s50, 1
          %s167 = smul.addr %s166, 32
          %s168 = scalar_lea.vmem [#allocation2], %s167
          %169 = dma.done %s165, 512
        $region36: #{tpu_custom_call.1} parent=31 // pred_fallthru
          _
      $region32: #{tpu_custom_call.1} parent=5 // pred_fallthru
        _
    $region6: #{tpu_custom_call.1} parent=1 // loop_footer
      %s14 = sadd.s32 1, %s10
    $region7: #{tpu_custom_call.1} parent=1 // loop_footer_branch
      %9 = sbr.rel target = $region3
    $region8: #{tpu_custom_call.1} parent=1 // loop_exit
      _
    %170 = vsyncpa [#allocation3], 1
    %s171 = scalar_lea.sflag [#allocation3], 1
    %172 = vsyncpa %s171, 1

</llo_original>
